<compile_context>
chip_gen: v6e
topology: v6e:2x2x1
jax: 0.10.0
libtpu: 0.0.40
codegen_flags: <defaults>
</compile_context>

<pallas_src>
import functools

import jax
import jax.numpy as jnp
from jax.experimental import pallas as pl
from jax.experimental.pallas import tpu as pltpu


def _grpo_kernel(pi_old_ref, pi_ref, ref_ref, adv_ref, *rest,
                 epsilon: float, has_mask: bool):
    if has_mask:
        mask_ref, out_ref = rest
    else:
        (out_ref,) = rest

    pi_old = pi_old_ref[...].astype(jnp.float32)   # [Bt, St]
    pi = pi_ref[...].astype(jnp.float32)           # [Bt, St]
    ref_lp = ref_ref[...].astype(jnp.float32)      # [Bt, St]
    adv = adv_ref[...].astype(jnp.float32)         # [Bt, 1] -> broadcasts over lanes

    # ratios = exp(pi - pi_old); clipped ratios
    ratios = jnp.exp(pi - pi_old)
    clipped = jnp.clip(ratios, 1.0 - epsilon, 1.0 + epsilon)
    plc = adv * clipped
    plu = adv * ratios
    lt = plc < plu                              # reuse one compare for both metrics
    policy_tok = jnp.where(lt, plc, plu)        # == minimum(plc, plu)
    clip_tok = lt.astype(jnp.float32)

    diff = ref_lp - pi
    kl_tok = jnp.exp(diff) - diff - 1.0

    if has_mask:
        m_raw = mask_ref[...]
        if m_raw.dtype == jnp.bool_:
            # Bool tile consumed directly: mask via selects, no float mask stream.
            p_policy = jnp.sum(jnp.where(m_raw, policy_tok, 0.0))
            p_clip = jnp.sum(jnp.where(m_raw, clip_tok, 0.0))
            p_kl = jnp.sum(jnp.where(m_raw, kl_tok, 0.0))
            p_mask = jnp.sum(jnp.where(m_raw, 1.0, 0.0))
        else:
            m = m_raw.astype(jnp.float32)
            p_policy = jnp.sum(policy_tok * m)
            p_clip = jnp.sum(clip_tok * m)
            p_kl = jnp.sum(kl_tok * m)
            p_mask = jnp.sum(m)
    else:
        p_policy = jnp.sum(policy_tok)
        p_clip = jnp.sum(clip_tok)
        p_kl = jnp.sum(kl_tok)
        p_mask = jnp.float32(0.0)       # denominator is the static B*S in the wrapper
    p_ratio = jnp.sum(ratios)           # NOTE: unmasked sum (torch uses ratios.mean())

    # Scatter the 5 tile-partials into a lane-dense (8, 128) block (one full,
    # unmasked vst).  Once per (i, k) tile -> amortized over the large tiles.
    row = jax.lax.broadcasted_iota(jnp.int32, (8, 128), 0)
    out_ref[...] = jnp.where(row == 0, p_policy,
                   jnp.where(row == 1, p_clip,
                   jnp.where(row == 2, p_kl,
                   jnp.where(row == 3, p_ratio,
                   jnp.where(row == 4, p_mask, 0.0)))))


def _sublane_multiple(*dtypes):
    """Sublane alignment required by the narrowest participating dtype."""
    m = 8
    for dt in dtypes:
        bits = jnp.dtype(dt).itemsize * 8
        m = max(m, 256 // bits)   # f32 -> 8, bf16 -> 16, int8/bool -> 32
    return m


_S_CANDS = (16384, 8192, 4096, 2048, 1024, 512, 256, 128)
_B_CANDS = (1024, 512, 256, 128, 64, 32, 16, 8)


def _pick_tiles(B, S, subm, bytes_per_token, *, input_budget=12 * 1024 * 1024):
    """VMEM-budget-aware tile picker.

    `bytes_per_token` already includes double-buffering of all streaming
    inputs; `input_budget` (~12 MiB) leaves headroom under vmem_limit_bytes
    (40 MiB) for in-kernel f32 intermediates and compiler scratch on all of
    v5e/v6e/v7x.
    """
    max_tok = max(input_budget // bytes_per_token, subm * 128)

    block_s = None
    for s in _S_CANDS:
        if S % s == 0 and subm * s <= max_tok:
            block_s = s
            break
    if block_s is None:
        # TODO(synk): dims with no aligned divisor fall back to a full-dim
        # block instead of padded/masked partial tiles.
        block_s = S

    block_b = None
    for b in _B_CANDS:
        if b % subm == 0 and B % b == 0 and b * block_s <= max_tok:
            block_b = b
            break
    if block_b is None:
        block_b = subm if B % subm == 0 else B

    # v7x megacore: make sure some parallel axis has extent >= 2 when possible
    # so both TensorCores stream HBM (neutral on single-TC v5e/v6e).
    if B // block_b == 1 and S // block_s == 1:
        new_b = None
        for b in _B_CANDS:
            if b < block_b and b % subm == 0 and B % b == 0:
                new_b = b
                break
        if new_b is not None:
            block_b = new_b
        else:
            for s in _S_CANDS:
                if s < block_s and S % s == 0:
                    block_s = s
                    break
    return block_b, block_s


def grpo_loss(pi_old_logprobs, pi_logprobs, ref_logprobs, advantages,
              padding_masks=None, *, epsilon: float = 0.1, kl_coeff: float = 0.1,
              block_b=None, block_s=None):
    """Returns (loss, policy_loss, kl_loss, ratios_mean, clipfrac) as f32 scalars."""
    B, S = pi_logprobs.shape
    has_mask = padding_masks is not None

    stream_dtypes = [pi_old_logprobs.dtype, pi_logprobs.dtype, ref_logprobs.dtype]
    if has_mask:
        # Bool mask is fed directly (no wrapper-side int8 copy = no extra HBM pass).
        stream_dtypes.append(padding_masks.dtype)
    subm = _sublane_multiple(*stream_dtypes)
    bytes_per_token = 2 * sum(jnp.dtype(dt).itemsize for dt in stream_dtypes)

    auto_b, auto_s = _pick_tiles(B, S, subm, bytes_per_token)
    if block_b is None:
        block_b = auto_b
    if block_s is None:
        block_s = auto_s
    assert B % block_b == 0 and S % block_s == 0, "tile sizes must divide (B, S)"
    n_b, n_s = B // block_b, S // block_s

    adv = advantages.astype(jnp.float32).reshape(B, 1)

    tok_spec = pl.BlockSpec((block_b, block_s), lambda i, k: (i, k))
    args = [pi_old_logprobs, pi_logprobs, ref_logprobs, adv]
    in_specs = [tok_spec, tok_spec, tok_spec,
                pl.BlockSpec((block_b, 1), lambda i, k: (i, 0))]
    if has_mask:
        args.append(padding_masks)
        in_specs.append(tok_spec)

    kernel = functools.partial(_grpo_kernel, epsilon=epsilon, has_mask=has_mask)
    partials = pl.pallas_call(
        kernel,
        grid=(n_b, n_s),
        in_specs=in_specs,
        # Each (i, k) grid point owns its own lane-dense (8, 128) partial block,
        # so both grid axes can be "parallel" (v7x megacore sharding).
        out_specs=pl.BlockSpec((None, None, 8, 128), lambda i, k: (i, k, 0, 0)),
        out_shape=jax.ShapeDtypeStruct((n_b, n_s, 8, 128), jnp.float32),
        compiler_params=pltpu.CompilerParams(
            dimension_semantics=("parallel", "parallel"),
            # 40 MiB: safe on v5e/v6e (128 MiB physical) and within the
            # recommended 40-48 MiB cap on v7x (64 MiB physical).
            vmem_limit_bytes=40 * 1024 * 1024),
    )(*args)

    # Tiny scalar epilogue in JAX: sum the per-tile partials and normalize.
    sums = partials[:, :, :, 0].sum(axis=(0, 1))          # (8,) f32
    p_policy, p_clip, p_kl, p_ratio, p_mask = (sums[0], sums[1], sums[2],
                                               sums[3], sums[4])
    n_tok = jnp.float32(B * S)
    mask_sum = p_mask if has_mask else n_tok
    inv = 1.0 / mask_sum                # NaN/Inf if all tokens padded (as torch)
    policy_loss = p_policy * inv
    clipfrac = p_clip * inv
    kl_loss = p_kl * inv
    ratios_mean = p_ratio / n_tok       # unmasked mean, as in torch
    loss = -(policy_loss - kl_coeff * kl_loss)
    return loss, policy_loss, kl_loss, ratios_mean, clipfrac


def _grpo_loss_ref(pi_old, pi, ref_lp, adv, mask, epsilon=0.1, kl_coeff=0.1):
    """Pure-JAX reference mirroring the torch module (f32 math)."""
    pi_old = pi_old.astype(jnp.float32)
    pi = pi.astype(jnp.float32)
    ref_lp = ref_lp.astype(jnp.float32)
    ratios = jnp.exp(pi - pi_old)
    clipped = jnp.clip(ratios, 1.0 - epsilon, 1.0 + epsilon)
    a = adv.astype(jnp.float32)[:, None]
    plc = a * clipped
    plu = a * ratios
    m = jnp.ones_like(ratios) if mask is None else mask.astype(jnp.float32)
    msum = m.sum()
    clipfrac = ((plc < plu).astype(jnp.float32) * m).sum() / msum
    policy_loss = (jnp.minimum(plc, plu) * m).sum() / msum
    diff = ref_lp - pi
    kl = ((jnp.exp(diff) - diff - 1.0) * m).sum() / msum
    loss = -(policy_loss - kl_coeff * kl)
    return loss, policy_loss, kl, ratios.mean(), clipfrac


if __name__ == "__main__":
    key = jax.random.PRNGKey(0)
    B, S = 64, 256          # B = batch_size * num_groups, S = seq_len (small demo)
    k1, k2, k3, k4, k5 = jax.random.split(key, 5)

    pi_old_logprobs = -1.0 + 0.1 * jax.random.normal(k1, (B, S), jnp.float32)
    pi_logprobs = pi_old_logprobs + 0.05 * jax.random.normal(k2, (B, S), jnp.float32)
    ref_logprobs = pi_old_logprobs + 0.05 * jax.random.normal(k3, (B, S), jnp.float32)
    advantages = jax.random.normal(k4, (B,), jnp.float32)
    padding_masks = jax.random.uniform(k5, (B, S)) > 0.2   # True = keep token

    # 1) masked, f32 logprobs + raw bool mask, forced small tiles -> (2, 2) grid
    #    (multi-tile along both parallel axes, per-(i,k) partial blocks).
    outs = grpo_loss(pi_old_logprobs, pi_logprobs, ref_logprobs, advantages,
                     padding_masks, epsilon=0.1, kl_coeff=0.1,
                     block_b=32, block_s=128)
    outs = jax.block_until_ready(outs)
    want = _grpo_loss_ref(pi_old_logprobs, pi_logprobs, ref_logprobs,
                          advantages, padding_masks)
    for got, exp in zip(outs, want):
        assert jnp.allclose(got, exp, rtol=1e-4, atol=1e-5), (got, exp)

    # 2) masked, native bf16 logprobs + bool mask, auto tile selection
    #    (exercises the VMEM-budget tile picker + the >=2-extent split).
    pi_old_bf, pi_bf, ref_bf = (x.astype(jnp.bfloat16)
                                for x in (pi_old_logprobs, pi_logprobs, ref_logprobs))
    outs2 = grpo_loss(pi_old_bf, pi_bf, ref_bf, advantages, padding_masks,
                      epsilon=0.1, kl_coeff=0.1)
    outs2 = jax.block_until_ready(outs2)
    want2 = _grpo_loss_ref(pi_old_bf, pi_bf, ref_bf, advantages, padding_masks)
    for got, exp in zip(outs2, want2):
        assert jnp.allclose(got, exp, rtol=1e-4, atol=1e-5), (got, exp)

    # 3) maskless, native bf16 logprobs (no mask stream, static denominator).
    outs3 = grpo_loss(pi_old_bf, pi_bf, ref_bf, advantages, None,
                      epsilon=0.1, kl_coeff=0.1)
    outs3 = jax.block_until_ready(outs3)
    want3 = _grpo_loss_ref(pi_old_bf, pi_bf, ref_bf, advantages, None)
    for got, exp in zip(outs3, want3):
        assert jnp.allclose(got, exp, rtol=1e-4, atol=1e-5), (got, exp)

    print("KERNEL_OK")
</pallas_src>

<mosaic_0001>
module attributes {stable_mosaic.version = 11 : i64} {
  func.func @_grpo_kernel(%arg0: i32, %arg1: i32, %arg2: memref<32x128xf32, #tpu.memory_space<vmem>>, %arg3: memref<32x128xf32, #tpu.memory_space<vmem>>, %arg4: memref<32x128xf32, #tpu.memory_space<vmem>>, %arg5: memref<32x1xf32, #tpu.memory_space<vmem>>, %arg6: memref<32x128xi32, #tpu.memory_space<vmem>>, %arg7: memref<1x1x8x128xf32, #tpu.memory_space<vmem>>) attributes {dimension_semantics = [#tpu.dimension_semantics<parallel>, #tpu.dimension_semantics<parallel>], iteration_bounds = array<i64: 2, 2>, scalar_prefetch = 0 : i64, scratch_operands = 0 : i64, tpu.core_type = #tpu.core_type<tc>, window_params = [{transform_indices = @transform_0, window_bounds = array<i64: 32, 128>}, {transform_indices = @transform_1, window_bounds = array<i64: 32, 128>}, {transform_indices = @transform_2, window_bounds = array<i64: 32, 128>}, {transform_indices = @transform_3, window_bounds = array<i64: 32, 1>}, {transform_indices = @transform_4, window_bounds = array<i64: 32, 128>}, {transform_indices = @transform_5, window_bounds = array<i64: 1, 1, 8, 128>}]} {
    %c0 = arith.constant 0 : index
    %c0_0 = arith.constant 0 : index
    %0 = vector.load %arg2[%c0, %c0_0] : memref<32x128xf32, #tpu.memory_space<vmem>>, vector<32x128xf32>
    %c0_1 = arith.constant 0 : index
    %c0_2 = arith.constant 0 : index
    %1 = vector.load %arg3[%c0_1, %c0_2] : memref<32x128xf32, #tpu.memory_space<vmem>>, vector<32x128xf32>
    %c0_3 = arith.constant 0 : index
    %c0_4 = arith.constant 0 : index
    %2 = vector.load %arg4[%c0_3, %c0_4] : memref<32x128xf32, #tpu.memory_space<vmem>>, vector<32x128xf32>
    %c0_5 = arith.constant 0 : index
    %c0_6 = arith.constant 0 : index
    %3 = vector.load %arg5[%c0_5, %c0_6] : memref<32x1xf32, #tpu.memory_space<vmem>>, vector<32x1xf32>
    %4 = arith.subf %1, %0 : vector<32x128xf32>
    %5 = math.exp %4 : vector<32x128xf32>
    %cst = arith.constant 0.899999976 : f32
    %cst_7 = arith.constant 1.100000e+00 : f32
    %6 = vector.broadcast %cst : f32 to vector<32x128xf32>
    %7 = arith.maximumf %6, %5 : vector<32x128xf32>
    %8 = vector.broadcast %cst_7 : f32 to vector<32x128xf32>
    %9 = arith.minimumf %8, %7 : vector<32x128xf32>
    %10 = vector.broadcast %3 : vector<32x1xf32> to vector<32x128xf32>
    %11 = arith.mulf %10, %9 : vector<32x128xf32>
    %12 = vector.broadcast %3 : vector<32x1xf32> to vector<32x128xf32>
    %13 = arith.mulf %12, %5 : vector<32x128xf32>
    %14 = arith.cmpf olt, %11, %13 : vector<32x128xf32>
    %15 = arith.select %14, %11, %13 : vector<32x128xi1>, vector<32x128xf32>
    %16 = arith.extui %14 : vector<32x128xi1> to vector<32x128xi32>
    %17 = arith.sitofp %16 : vector<32x128xi32> to vector<32x128xf32>
    %18 = arith.subf %2, %1 : vector<32x128xf32>
    %19 = math.exp %18 : vector<32x128xf32>
    %20 = arith.subf %19, %18 : vector<32x128xf32>
    %cst_8 = arith.constant 1.000000e+00 : f32
    %21 = vector.broadcast %cst_8 : f32 to vector<32x128xf32>
    %22 = arith.subf %20, %21 : vector<32x128xf32>
    %c0_9 = arith.constant 0 : index
    %c0_10 = arith.constant 0 : index
    %23 = vector.load %arg6[%c0_9, %c0_10] : memref<32x128xi32, #tpu.memory_space<vmem>>, vector<32x128xi32>
    %cst_11 = arith.constant dense<0> : vector<32x128xi32>
    %24 = arith.cmpi ne, %23, %cst_11 : vector<32x128xi32>
    %cst_12 = arith.constant 0.000000e+00 : f32
    %25 = vector.broadcast %cst_12 : f32 to vector<32x128xf32>
    %26 = arith.select %24, %15, %25 : vector<32x128xi1>, vector<32x128xf32>
    %27 = vector.shape_cast %26 : vector<32x128xf32> to vector<1x32x128xf32>
    %cst_13 = arith.constant dense<0.000000e+00> : vector<1xf32>
    %28 = vector.multi_reduction <add>, %27, %cst_13 [1, 2] : vector<1x32x128xf32> to vector<1xf32>
    %29 = vector.shape_cast %28 : vector<1xf32> to vector<1x1x1xf32>
    %30 = vector.extract %29[0, 0, 0] : f32 from vector<1x1x1xf32>
    %cst_14 = arith.constant 0.000000e+00 : f32
    %31 = vector.broadcast %cst_14 : f32 to vector<32x128xf32>
    %32 = arith.select %24, %17, %31 : vector<32x128xi1>, vector<32x128xf32>
    %33 = vector.shape_cast %32 : vector<32x128xf32> to vector<1x32x128xf32>
    %cst_15 = arith.constant dense<0.000000e+00> : vector<1xf32>
    %34 = vector.multi_reduction <add>, %33, %cst_15 [1, 2] : vector<1x32x128xf32> to vector<1xf32>
    %35 = vector.shape_cast %34 : vector<1xf32> to vector<1x1x1xf32>
    %36 = vector.extract %35[0, 0, 0] : f32 from vector<1x1x1xf32>
    %cst_16 = arith.constant 0.000000e+00 : f32
    %37 = vector.broadcast %cst_16 : f32 to vector<32x128xf32>
    %38 = arith.select %24, %22, %37 : vector<32x128xi1>, vector<32x128xf32>
    %39 = vector.shape_cast %38 : vector<32x128xf32> to vector<1x32x128xf32>
    %cst_17 = arith.constant dense<0.000000e+00> : vector<1xf32>
    %40 = vector.multi_reduction <add>, %39, %cst_17 [1, 2] : vector<1x32x128xf32> to vector<1xf32>
    %41 = vector.shape_cast %40 : vector<1xf32> to vector<1x1x1xf32>
    %42 = vector.extract %41[0, 0, 0] : f32 from vector<1x1x1xf32>
    %cst_18 = arith.constant 1.000000e+00 : f32
    %cst_19 = arith.constant 0.000000e+00 : f32
    %43 = vector.broadcast %cst_18 : f32 to vector<32x128xf32>
    %44 = vector.broadcast %cst_19 : f32 to vector<32x128xf32>
    %45 = arith.select %24, %43, %44 : vector<32x128xi1>, vector<32x128xf32>
    %46 = vector.shape_cast %45 : vector<32x128xf32> to vector<1x32x128xf32>
    %cst_20 = arith.constant dense<0.000000e+00> : vector<1xf32>
    %47 = vector.multi_reduction <add>, %46, %cst_20 [1, 2] : vector<1x32x128xf32> to vector<1xf32>
    %48 = vector.shape_cast %47 : vector<1xf32> to vector<1x1x1xf32>
    %49 = vector.extract %48[0, 0, 0] : f32 from vector<1x1x1xf32>
    %50 = vector.shape_cast %5 : vector<32x128xf32> to vector<1x32x128xf32>
    %cst_21 = arith.constant dense<0.000000e+00> : vector<1xf32>
    %51 = vector.multi_reduction <add>, %50, %cst_21 [1, 2] : vector<1x32x128xf32> to vector<1xf32>
    %52 = vector.shape_cast %51 : vector<1xf32> to vector<1x1x1xf32>
    %53 = vector.extract %52[0, 0, 0] : f32 from vector<1x1x1xf32>
    %54 = tpu.iota {dimensions = array<i32: 0>} : vector<8x128xi32>
    %c0_i32 = arith.constant 0 : i32
    %55 = vector.broadcast %c0_i32 : i32 to vector<8x128xi32>
    %56 = arith.cmpi eq, %54, %55 : vector<8x128xi32>
    %c1_i32 = arith.constant 1 : i32
    %57 = vector.broadcast %c1_i32 : i32 to vector<8x128xi32>
    %58 = arith.cmpi eq, %54, %57 : vector<8x128xi32>
    %c2_i32 = arith.constant 2 : i32
    %59 = vector.broadcast %c2_i32 : i32 to vector<8x128xi32>
    %60 = arith.cmpi eq, %54, %59 : vector<8x128xi32>
    %c3_i32 = arith.constant 3 : i32
    %61 = vector.broadcast %c3_i32 : i32 to vector<8x128xi32>
    %62 = arith.cmpi eq, %54, %61 : vector<8x128xi32>
    %c4_i32 = arith.constant 4 : i32
    %63 = vector.broadcast %c4_i32 : i32 to vector<8x128xi32>
    %64 = arith.cmpi eq, %54, %63 : vector<8x128xi32>
    %cst_22 = arith.constant 0.000000e+00 : f32
    %65 = vector.broadcast %49 : f32 to vector<8x128xf32>
    %66 = vector.broadcast %cst_22 : f32 to vector<8x128xf32>
    %67 = arith.select %64, %65, %66 : vector<8x128xi1>, vector<8x128xf32>
    %68 = vector.broadcast %53 : f32 to vector<8x128xf32>
    %69 = arith.select %62, %68, %67 : vector<8x128xi1>, vector<8x128xf32>
    %70 = vector.broadcast %42 : f32 to vector<8x128xf32>
    %71 = arith.select %60, %70, %69 : vector<8x128xi1>, vector<8x128xf32>
    %72 = vector.broadcast %36 : f32 to vector<8x128xf32>
    %73 = arith.select %58, %72, %71 : vector<8x128xi1>, vector<8x128xf32>
    %74 = vector.broadcast %30 : f32 to vector<8x128xf32>
    %75 = arith.select %56, %74, %73 : vector<8x128xi1>, vector<8x128xf32>
    %c0_23 = arith.constant 0 : index
    %c0_24 = arith.constant 0 : index
    %c0_25 = arith.constant 0 : index
    %c0_26 = arith.constant 0 : index
    %76 = vector.load %arg7[%c0_23, %c0_24, %c0_25, %c0_26] : memref<1x1x8x128xf32, #tpu.memory_space<vmem>>, vector<1x1x8x128xf32>
    %77 = vector.shape_cast %76 : vector<1x1x8x128xf32> to vector<8x128xf32>
    %78 = vector.shape_cast %75 : vector<8x128xf32> to vector<1x1x8x128xf32>
    tpu.vector_store %arg7[%c0_23, %c0_24, %c0_25, %c0_26], %78 {strides = array<i32>} : memref<1x1x8x128xf32, #tpu.memory_space<vmem>>, vector<1x1x8x128xf32>,
    return
  }
  func.func @transform_0(%arg0: i32, %arg1: i32) -> (i32, i32) {
    %c0_i32 = arith.constant 0 : i32
    return %arg0, %arg1 : i32, i32
  }
  func.func @transform_1(%arg0: i32, %arg1: i32) -> (i32, i32) {
    %c0_i32 = arith.constant 0 : i32
    return %arg0, %arg1 : i32, i32
  }
  func.func @transform_2(%arg0: i32, %arg1: i32) -> (i32, i32) {
    %c0_i32 = arith.constant 0 : i32
    return %arg0, %arg1 : i32, i32
  }
  func.func @transform_3(%arg0: i32, %arg1: i32) -> (i32, i32) {
    %c0_i32 = arith.constant 0 : i32
    %c0_i32_0 = arith.constant 0 : i32
    return %arg0, %c0_i32 : i32, i32
  }
  func.func @transform_4(%arg0: i32, %arg1: i32) -> (i32, i32) {
    %c0_i32 = arith.constant 0 : i32
    return %arg0, %arg1 : i32, i32
  }
  func.func @transform_5(%arg0: i32, %arg1: i32) -> (i32, i32, i32, i32) {
    %c0_i32 = arith.constant 0 : i32
    %c0_i32_0 = arith.constant 0 : i32
    %c0_i32_1 = arith.constant 0 : i32
    return %arg0, %arg1, %c0_i32, %c0_i32_0 : i32, i32, i32, i32
  }
}

</mosaic_0001>

<llo_original>
// kernel: tpu_custom_call.1
$region0: #{tpu_custom_call.1}
  #allocation0 [shape = 'u32[]', space=smem, size = 0x4, offset = 0x4, fixed_abs, tag = 'smem constant byte address 0x4 - core index']
  #allocation1 [shape = 'u32[144,128]{1,0:T(1,128)}', space=vmem, size = 0x12000, scoped, tag = 'internal scratch']
  %s0 = inlined_call_operand.vmem [shape: f32[64,256], index: 0, kind: input, shape index: {}]
  %s1 = inlined_call_operand.hbm [shape: f32[64,256], index: 1, kind: input, shape index: {}]
  %s2 = inlined_call_operand.hbm [shape: f32[64,256], index: 2, kind: input, shape index: {}]
  %s3 = inlined_call_operand.vmem [shape: f32[64,1], index: 3, kind: input, shape index: {}]
  %s4 = inlined_call_operand.vmem [shape: s32[64,256], index: 4, kind: input, shape index: {}]
  %s5 = inlined_call_operand.hbm [shape: f32[2,2,8,128], index: 5, kind: output, shape index: {}]
  %s6 = sld [smem:[#allocation0]]
  $region137: #{tpu_custom_call.1} parent=0
    _
  %s8 = ssub.s32 1, %s6
  %s9 = scalar_select 0, %s8, %s6
  $region1: #{tpu_custom_call.1} parent=0
    #allocation2 [shape = 'u8[32768]{0}', space=vmem, size = 0x8000, scoped, tag = 'input window, operand 0']
    #allocation3 [shape = 'u8[32768]{0}', space=vmem, size = 0x8000, scoped, tag = 'input window, operand 1']
    #allocation4 [shape = 's32[2]{0}', space=sflag, size = 0x8, scoped, tag = 'scoped memory for tpu_custom_call.1']
    #allocation5 [shape = 's32[2]{0}', space=sflag, size = 0x8, scoped, tag = 'scoped memory for tpu_custom_call.1']
    #allocation6 [shape = 'u8[32768]{0}', space=vmem, size = 0x8000, scoped, tag = 'input window, operand 2']
    #allocation7 [shape = 's32[2]{0}', space=sflag, size = 0x8, scoped, tag = 'scoped memory for tpu_custom_call.1']
    #allocation8 [shape = 'u8[32768]{0}', space=vmem, size = 0x8000, scoped, tag = 'input window, operand 4']
    #allocation9 [shape = 'u8[8192]{0}', space=vmem, size = 0x2000, scoped, tag = 'output window, operand 0']
    %10 = vsyncpa [#allocation4], 0
    %s11 = scalar_lea.sflag [#allocation4], 1
    %12 = vsyncpa %s11, 0
    %13 = vsyncpa [#allocation7], 0
    %s14 = scalar_lea.sflag [#allocation7], 1
    %15 = vsyncpa %s14, 0
    %16 = vsyncpa [#allocation5], 0
    %s17 = scalar_lea.sflag [#allocation5], 1
    %18 = vsyncpa %s17, 0
    loop: start=0, step=1, limit=6
    $region2: #{tpu_custom_call.1} parent=1 // loop_pre_header
      _
    $region3: #{tpu_custom_call.1} parent=1 // loop_header
      %s20 = sphi 0, %s24
      %p21 = scmp.ge.s32.totalorder %s20, 6
      %s27 = sphi 0, %s39
      %s28 = sphi 0, %s35
      %s29 = sphi 0, %s27
      %s30 = sphi 0, %s28
      %s31 = sphi 0, %s29
      %s32 = sphi 0, %s30
      %s44 = sphi 0, %s46
      %s47 = sphi 0, %s44
      %s48 = sphi 0, %s47
      %s64 = sphi 0, %s48
      %s72 = sphi 0, %s74
      %s75 = sphi 0, %s72
      %s76 = sphi 0, %s75
      %s92 = sphi 0, %s76
      %s100 = sphi 0, %s102
      %s103 = sphi 0, %s100
      %s104 = sphi 0, %s103
      %s120 = sphi 0, %s104
      %s126 = sphi 0, %s128
      %s129 = sphi 0, %s126
      %s130 = sphi 0, %s129
      %s146 = sphi 0, %s130
      %s154 = sphi 0, %s156
      %s157 = sphi 0, %s154
      %s158 = sphi 0, %s157
      %s174 = sphi 0, %s158
      %s182 = sphi 0, %s184
      %s185 = sphi 0, %s182
      %s186 = sphi 0, %s185
      %s202 = sphi 0, %s186
    $region4: #{tpu_custom_call.1} parent=1 // loop_header_branch
      %23 = sbr.rel (%p21) target = $region8
    $region5: #{tpu_custom_call.1} parent=1 // loop_body
      %s25 = ssub.s32 %s20, 1
      %s26 = ssub.s32 %s20, 2
      %s33 = sadd.s32 1, %s28
      %p34 = scmp.ge.s32.totalorder %s33, 2
      %s35 = scalar_select %p34, 0, %s33
      %s36 = sadd.s32 1, %s27
      %s37 = scalar_select %p34, %s36, %s27
      %p38 = scmp.ge.s32.totalorder %s37, 2
      %s39 = scalar_select %p38, 0, %s37
      %s40 = ssub.s32 %s27, %s39
      %s41 = ssub.s32 %s28, %s35
      %s42 = sor.u32 %s40, %s41
      %p43 = scmp.eq.s32.totalorder %s42, 0
      %s45 = sadd.s32 %s44, 1
      %s46 = scalar_select %p43, %s44, %s45
      %p49 = pneg %p43
      %p50 = scmp.eq.s32.totalorder %s20, 3
      %p51 = por %p49, %p50
      %p52 = scmp.ne.s32.totalorder %s44, %s47
      %p53 = scmp.eq.s32.totalorder %s20, 0
      %p54 = por %p52, %p53
      %p55 = scmp.ne.s32.totalorder %s44, %s47
      %p56 = scmp.eq.s32.totalorder %s25, 3
      %p57 = por %p55, %p56
      %p58 = scmp.ne.s32.totalorder %s47, %s48
      %p59 = scmp.eq.s32.totalorder %s25, 0
      %p60 = por %p58, %p59
      %p61 = scmp.ne.s32.totalorder %s47, %s48
      %p62 = scmp.eq.s32.totalorder %s26, 3
      %p63 = por %p61, %p62
      %p65 = scmp.ne.s32.totalorder %s48, %s64
      %p66 = scmp.eq.s32.totalorder %s26, 0
      %p67 = por %p65, %p66
      %s68 = ssub.s32 %s27, %s39
      %s69 = ssub.s32 %s28, %s35
      %s70 = sor.u32 %s68, %s69
      %p71 = scmp.eq.s32.totalorder %s70, 0
      %s73 = sadd.s32 %s72, 1
      %s74 = scalar_select %p71, %s72, %s73
      %p77 = pneg %p71
      %p78 = scmp.eq.s32.totalorder %s20, 3
      %p79 = por %p77, %p78
      %p80 = scmp.ne.s32.totalorder %s72, %s75
      %p81 = scmp.eq.s32.totalorder %s20, 0
      %p82 = por %p80, %p81
      %p83 = scmp.ne.s32.totalorder %s72, %s75
      %p84 = scmp.eq.s32.totalorder %s25, 3
      %p85 = por %p83, %p84
      %p86 = scmp.ne.s32.totalorder %s75, %s76
      %p87 = scmp.eq.s32.totalorder %s25, 0
      %p88 = por %p86, %p87
      %p89 = scmp.ne.s32.totalorder %s75, %s76
      %p90 = scmp.eq.s32.totalorder %s26, 3
      %p91 = por %p89, %p90
      %p93 = scmp.ne.s32.totalorder %s76, %s92
      %p94 = scmp.eq.s32.totalorder %s26, 0
      %p95 = por %p93, %p94
      %s96 = ssub.s32 %s27, %s39
      %s97 = ssub.s32 %s28, %s35
      %s98 = sor.u32 %s96, %s97
      %p99 = scmp.eq.s32.totalorder %s98, 0
      %s101 = sadd.s32 %s100, 1
      %s102 = scalar_select %p99, %s100, %s101
      %p105 = pneg %p99
      %p106 = scmp.eq.s32.totalorder %s20, 3
      %p107 = por %p105, %p106
      %p108 = scmp.ne.s32.totalorder %s100, %s103
      %p109 = scmp.eq.s32.totalorder %s20, 0
      %p110 = por %p108, %p109
      %p111 = scmp.ne.s32.totalorder %s100, %s103
      %p112 = scmp.eq.s32.totalorder %s25, 3
      %p113 = por %p111, %p112
      %p114 = scmp.ne.s32.totalorder %s103, %s104
      %p115 = scmp.eq.s32.totalorder %s25, 0
      %p116 = por %p114, %p115
      %p117 = scmp.ne.s32.totalorder %s103, %s104
      %p118 = scmp.eq.s32.totalorder %s26, 3
      %p119 = por %p117, %p118
      %p121 = scmp.ne.s32.totalorder %s104, %s120
      %p122 = scmp.eq.s32.totalorder %s26, 0
      %p123 = por %p121, %p122
      %s124 = ssub.s32 %s27, %s39
      %p125 = scmp.eq.s32.totalorder %s124, 0
      %s127 = sadd.s32 %s126, 1
      %s128 = scalar_select %p125, %s126, %s127
      %p131 = pneg %p125
      %p132 = scmp.eq.s32.totalorder %s20, 3
      %p133 = por %p131, %p132
      %p134 = scmp.ne.s32.totalorder %s126, %s129
      %p135 = scmp.eq.s32.totalorder %s20, 0
      %p136 = por %p134, %p135
      %p137 = scmp.ne.s32.totalorder %s126, %s129
      %p138 = scmp.eq.s32.totalorder %s25, 3
      %p139 = por %p137, %p138
      %p140 = scmp.ne.s32.totalorder %s129, %s130
      %p141 = scmp.eq.s32.totalorder %s25, 0
      %p142 = por %p140, %p141
      %p143 = scmp.ne.s32.totalorder %s129, %s130
      %p144 = scmp.eq.s32.totalorder %s26, 3
      %p145 = por %p143, %p144
      %p147 = scmp.ne.s32.totalorder %s130, %s146
      %p148 = scmp.eq.s32.totalorder %s26, 0
      %p149 = por %p147, %p148
      %s150 = ssub.s32 %s27, %s39
      %s151 = ssub.s32 %s28, %s35
      %s152 = sor.u32 %s150, %s151
      %p153 = scmp.eq.s32.totalorder %s152, 0
      %s155 = sadd.s32 %s154, 1
      %s156 = scalar_select %p153, %s154, %s155
      %p159 = pneg %p153
      %p160 = scmp.eq.s32.totalorder %s20, 3
      %p161 = por %p159, %p160
      %p162 = scmp.ne.s32.totalorder %s154, %s157
      %p163 = scmp.eq.s32.totalorder %s20, 0
      %p164 = por %p162, %p163
      %p165 = scmp.ne.s32.totalorder %s154, %s157
      %p166 = scmp.eq.s32.totalorder %s25, 3
      %p167 = por %p165, %p166
      %p168 = scmp.ne.s32.totalorder %s157, %s158
      %p169 = scmp.eq.s32.totalorder %s25, 0
      %p170 = por %p168, %p169
      %p171 = scmp.ne.s32.totalorder %s157, %s158
      %p172 = scmp.eq.s32.totalorder %s26, 3
      %p173 = por %p171, %p172
      %p175 = scmp.ne.s32.totalorder %s158, %s174
      %p176 = scmp.eq.s32.totalorder %s26, 0
      %p177 = por %p175, %p176
      %s178 = ssub.s32 %s27, %s39
      %s179 = ssub.s32 %s28, %s35
      %s180 = sor.u32 %s178, %s179
      %p181 = scmp.eq.s32.totalorder %s180, 0
      %s183 = sadd.s32 %s182, 1
      %s184 = scalar_select %p181, %s182, %s183
      %p187 = pneg %p181
      %p188 = scmp.eq.s32.totalorder %s20, 3
      %p189 = por %p187, %p188
      %p190 = scmp.ne.s32.totalorder %s182, %s185
      %p191 = scmp.eq.s32.totalorder %s20, 0
      %p192 = por %p190, %p191
      %p193 = scmp.ne.s32.totalorder %s182, %s185
      %p194 = scmp.eq.s32.totalorder %s25, 3
      %p195 = por %p193, %p194
      %p196 = scmp.ne.s32.totalorder %s185, %s186
      %p197 = scmp.eq.s32.totalorder %s25, 0
      %p198 = por %p196, %p197
      %p199 = scmp.ne.s32.totalorder %s185, %s186
      %p200 = scmp.eq.s32.totalorder %s26, 3
      %p201 = por %p199, %p200
      %p203 = scmp.ne.s32.totalorder %s186, %s202
      %p204 = scmp.eq.s32.totalorder %s26, 0
      %p205 = por %p203, %p204
      %p206 = scmp.le.s32.totalorder 1, %s20
      %p207 = scmp.lt.s32.totalorder %s20, 5
      %p208 = pnand %p206, %p207
      %p209 = pneg %p208
      // Predicated region
      $region9: #{tpu_custom_call.1} parent=5 // pred_check
        _
      $region10: #{tpu_custom_call.1} parent=5 // pred_check_branch
        %211 = sbr.rel (%p208) target = $region12
      $region11: #{tpu_custom_call.1} parent=5 // pred_region
        %s212 = ssub.s32 %s20, 1
      $region12: #{tpu_custom_call.1} parent=5 // pred_fallthru
        _
      %p213 = scmp.lt.s32.totalorder %s20, 4
      // Predicated region
      $region13: #{tpu_custom_call.1} parent=5 // pred_check
        %p214 = pneg %p213
      $region14: #{tpu_custom_call.1} parent=5 // pred_check_branch
        %216 = sbr.rel (%p214) target = $region16
      $region15: #{tpu_custom_call.1} parent=5 // pred_region
        // Predicated region
        $region17: #{tpu_custom_call.1} parent=15 // pred_check
          %p217 = pneg %p54
        $region18: #{tpu_custom_call.1} parent=15 // pred_check_branch
          %219 = sbr.rel (%p217) target = $region20
        $region19: #{tpu_custom_call.1} parent=15 // pred_region
          %s220 = sand.u32 %s44, 1
          %s221 = sand.u32 %s44, 1
          %s222 = smul.addr %s221, 32
          %s223 = scalar_lea.vmem [#allocation2], %s222
          %s224 = smul.u32 4, %s27
          %s225 = smul.addr %s224, 2
          %s226 = sadd.s32 %s28, %s225
          %s227 = smul.addr %s226, 8
          %s228 = scalar_lea.vmem %s0, %s227
          // Predicated region
          $region21: #{tpu_custom_call.1} parent=19 // pred_check
            _
          $region22: #{tpu_custom_call.1} parent=19 // pred_check_branch
            %230 = sbr.rel (0) target = $region24
          $region23: #{tpu_custom_call.1} parent=19 // pred_region
            // Predicated region
            $region25: #{tpu_custom_call.1} parent=23 // pred_check
              _
            $region26: #{tpu_custom_call.1} parent=23 // pred_check_branch
              %232 = sbr.rel (0) target = $region28
            $region27: #{tpu_custom_call.1} parent=23 // pred_region
              // Predicated region
              $region40: #{tpu_custom_call.1} parent=27 // pred_check
                _
              $region41: #{tpu_custom_call.1} parent=27 // pred_check_branch
                %254 = sbr.rel (0) target = $region43
              $region42: #{tpu_custom_call.1} parent=27 // pred_region
                loop: start=0, step=1, limit=1
                $region44: #{tpu_custom_call.1} parent=42 // loop_pre_header
                  _
                $region45: #{tpu_custom_call.1} parent=42 // loop_header
                  %s256 = sphi 0, %s260
                  %p257 = scmp.ge.s32.totalorder %s256, 1
                  %s261 = sphi %s228, %s228
                  %s262 = sphi %s223, %s223
                $region46: #{tpu_custom_call.1} parent=42 // loop_header_branch
                  %259 = sbr.rel (%p257) target = $region50
                $region47: #{tpu_custom_call.1} parent=42 // loop_body
                  %v263 = vld [vmem:[%s261] sm:$0xff]
                  %264 = vst [vmem:[%s262] sm:$0xff] %v263
                  %v265 = vld [vmem:[%s261 + $0x10] sm:$0xff]
                  %266 = vst [vmem:[%s262 + $0x8] sm:$0xff] %v265
                  %v267 = vld [vmem:[%s261 + $0x20] sm:$0xff]
                  %268 = vst [vmem:[%s262 + $0x10] sm:$0xff] %v267
                  %v269 = vld [vmem:[%s261 + $0x30] sm:$0xff]
                  %270 = vst [vmem:[%s262 + $0x18] sm:$0xff] %v269
                $region48: #{tpu_custom_call.1} parent=42 // loop_footer
                  %s260 = sadd.s32 1, %s256
                $region49: #{tpu_custom_call.1} parent=42 // loop_footer_branch
                  %255 = sbr.rel target = $region45
                $region50: #{tpu_custom_call.1} parent=42 // loop_exit
                  _
              $region43: #{tpu_custom_call.1} parent=27 // pred_fallthru
                _
              // Predicated region
              $region51: #{tpu_custom_call.1} parent=27 // pred_check
                _
              $region52: #{tpu_custom_call.1} parent=27 // pred_check_branch
                %272 = sbr.rel target = $region54
              $region53: #{tpu_custom_call.1} parent=27 // pred_region
                _
              $region54: #{tpu_custom_call.1} parent=27 // pred_fallthru
                _
            $region28: #{tpu_custom_call.1} parent=23 // pred_fallthru
              _
            // Predicated region
            $region29: #{tpu_custom_call.1} parent=23 // pred_check
              _
            $region30: #{tpu_custom_call.1} parent=23 // pred_check_branch
              %234 = sbr.rel target = $region32
            $region31: #{tpu_custom_call.1} parent=23 // pred_region
              %s236 = ssub.s32 256, 1
              loop: start=0, step=1, limit=1
              $region33: #{tpu_custom_call.1} parent=31 // loop_pre_header
                _
              $region34: #{tpu_custom_call.1} parent=31 // loop_header
                %s238 = sphi 0, %s242
                %p239 = scmp.ge.s32.totalorder %s238, 1
                %s243 = sphi %s228, %s228
                %s244 = sphi %s223, %s223
              $region35: #{tpu_custom_call.1} parent=31 // loop_header_branch
                %241 = sbr.rel (%p239) target = $region39
              $region36: #{tpu_custom_call.1} parent=31 // loop_body
                %v245 = vld [vmem:[%s243] sm:%s236]
                %246 = vst [vmem:[%s244] sm:%s236] %v245
                %v247 = vld [vmem:[%s243 + $0x10] sm:%s236]
                %248 = vst [vmem:[%s244 + $0x8] sm:%s236] %v247
                %v249 = vld [vmem:[%s243 + $0x20] sm:%s236]
                %250 = vst [vmem:[%s244 + $0x10] sm:%s236] %v249
                %v251 = vld [vmem:[%s243 + $0x30] sm:%s236]
                %252 = vst [vmem:[%s244 + $0x18] sm:%s236] %v251
              $region37: #{tpu_custom_call.1} parent=31 // loop_footer
                %s242 = sadd.s32 1, %s238
              $region38: #{tpu_custom_call.1} parent=31 // loop_footer_branch
                %237 = sbr.rel target = $region34
              $region39: #{tpu_custom_call.1} parent=31 // loop_exit
                _
            $region32: #{tpu_custom_call.1} parent=23 // pred_fallthru
              _
          $region24: #{tpu_custom_call.1} parent=19 // pred_fallthru
            _
          %273 = vnop
        $region20: #{tpu_custom_call.1} parent=15 // pred_fallthru
          _
        // Predicated region
        $region55: #{tpu_custom_call.1} parent=15 // pred_check
          %p274 = pneg %p82
        $region56: #{tpu_custom_call.1} parent=15 // pred_check_branch
          %276 = sbr.rel (%p274) target = $region58
        $region57: #{tpu_custom_call.1} parent=15 // pred_region
          %s277 = sand.u32 %s72, 1
          %s278 = scalar_lea.sflag [#allocation4], %s277
          %s279 = sand.u32 %s72, 1
          %s280 = smul.addr %s279, 32
          %s281 = scalar_lea.vmem [#allocation3], %s280
          %s282 = smul.u32 4, %s27
          %s284 = ssub.s32 512, 512
          %285 = vsyncadd %s278, %s284
          %s286 = smul.addr %s282, 2
          %s287 = sadd.s32 %s28, %s286
          %s288 = smul.addr %s287, 128
          %s289 = scalar_lea.hbm %s1, %s288
          %s290 = sshll.u32 %s281, 4
          %s291 = int_to_ptr.vmem [resolvable:$true] %s290
          %296 = dma.hbm_to_vmem [thread:$0]  %s289, 512, %s291, %s278, 256, 128, 8
        $region58: #{tpu_custom_call.1} parent=15 // pred_fallthru
          _
        // Predicated region
        $region59: #{tpu_custom_call.1} parent=15 // pred_check
          %p297 = pneg %p110
        $region60: #{tpu_custom_call.1} parent=15 // pred_check_branch
          %299 = sbr.rel (%p297) target = $region62
        $region61: #{tpu_custom_call.1} parent=15 // pred_region
          %s300 = sand.u32 %s100, 1
          %s301 = scalar_lea.sflag [#allocation7], %s300
          %s302 = sand.u32 %s100, 1
          %s303 = smul.addr %s302, 32
          %s304 = scalar_lea.vmem [#allocation6], %s303
          %s305 = smul.u32 4, %s27
          %s307 = ssub.s32 512, 512
          %308 = vsyncadd %s301, %s307
          %s309 = smul.addr %s305, 2
          %s310 = sadd.s32 %s28, %s309
          %s311 = smul.addr %s310, 128
          %s312 = scalar_lea.hbm %s2, %s311
          %s313 = sshll.u32 %s304, 4
          %s314 = int_to_ptr.vmem [resolvable:$true] %s313
          %319 = dma.hbm_to_vmem [thread:$0]  %s312, 512, %s314, %s301, 256, 128, 8
        $region62: #{tpu_custom_call.1} parent=15 // pred_fallthru
          _
        // Predicated region
        $region63: #{tpu_custom_call.1} parent=15 // pred_check
          %p320 = pneg %p136
        $region64: #{tpu_custom_call.1} parent=15 // pred_check_branch
          %322 = sbr.rel (%p320) target = $region66
        $region65: #{tpu_custom_call.1} parent=15 // pred_region
          %s323 = smul.u32 4, %s27
          %p324 = scmp.lt.s32.totalorder %s323, 7
          %s325 = scalar_select %p324, %s323, 7
          %s326 = smul.addr %s325, 8
          %s327 = scalar_lea.vmem %s3, %s326
          %s328 = smul.u32 4, %s27
        $region66: #{tpu_custom_call.1} parent=15 // pred_fallthru
          _
        // Predicated region
        $region67: #{tpu_custom_call.1} parent=15 // pred_check
          %p329 = pneg %p164
        $region68: #{tpu_custom_call.1} parent=15 // pred_check_branch
          %331 = sbr.rel (%p329) target = $region70
        $region69: #{tpu_custom_call.1} parent=15 // pred_region
          %s332 = sand.u32 %s154, 1
          %s333 = sand.u32 %s154, 1
          %s334 = smul.addr %s333, 32
          %s335 = scalar_lea.vmem [#allocation8], %s334
          %s336 = smul.u32 4, %s27
          %s337 = smul.addr %s336, 2
          %s338 = sadd.s32 %s28, %s337
          %s339 = smul.addr %s338, 8
          %s340 = scalar_lea.vmem %s4, %s339
          // Predicated region
          $region71: #{tpu_custom_call.1} parent=69 // pred_check
            _
          $region72: #{tpu_custom_call.1} parent=69 // pred_check_branch
            %342 = sbr.rel (0) target = $region74
          $region73: #{tpu_custom_call.1} parent=69 // pred_region
            // Predicated region
            $region75: #{tpu_custom_call.1} parent=73 // pred_check
              _
            $region76: #{tpu_custom_call.1} parent=73 // pred_check_branch
              %344 = sbr.rel (0) target = $region78
            $region77: #{tpu_custom_call.1} parent=73 // pred_region
              // Predicated region
              $region90: #{tpu_custom_call.1} parent=77 // pred_check
                _
              $region91: #{tpu_custom_call.1} parent=77 // pred_check_branch
                %366 = sbr.rel (0) target = $region93
              $region92: #{tpu_custom_call.1} parent=77 // pred_region
                loop: start=0, step=1, limit=1
                $region94: #{tpu_custom_call.1} parent=92 // loop_pre_header
                  _
                $region95: #{tpu_custom_call.1} parent=92 // loop_header
                  %s368 = sphi 0, %s372
                  %p369 = scmp.ge.s32.totalorder %s368, 1
                  %s373 = sphi %s340, %s340
                  %s374 = sphi %s335, %s335
                $region96: #{tpu_custom_call.1} parent=92 // loop_header_branch
                  %371 = sbr.rel (%p369) target = $region100
                $region97: #{tpu_custom_call.1} parent=92 // loop_body
                  %v375 = vld [vmem:[%s373] sm:$0xff]
                  %376 = vst [vmem:[%s374] sm:$0xff] %v375
                  %v377 = vld [vmem:[%s373 + $0x10] sm:$0xff]
                  %378 = vst [vmem:[%s374 + $0x8] sm:$0xff] %v377
                  %v379 = vld [vmem:[%s373 + $0x20] sm:$0xff]
                  %380 = vst [vmem:[%s374 + $0x10] sm:$0xff] %v379
                  %v381 = vld [vmem:[%s373 + $0x30] sm:$0xff]
                  %382 = vst [vmem:[%s374 + $0x18] sm:$0xff] %v381
                $region98: #{tpu_custom_call.1} parent=92 // loop_footer
                  %s372 = sadd.s32 1, %s368
                $region99: #{tpu_custom_call.1} parent=92 // loop_footer_branch
                  %367 = sbr.rel target = $region95
                $region100: #{tpu_custom_call.1} parent=92 // loop_exit
                  _
              $region93: #{tpu_custom_call.1} parent=77 // pred_fallthru
                _
              // Predicated region
              $region101: #{tpu_custom_call.1} parent=77 // pred_check
                _
              $region102: #{tpu_custom_call.1} parent=77 // pred_check_branch
                %384 = sbr.rel target = $region104
              $region103: #{tpu_custom_call.1} parent=77 // pred_region
                _
              $region104: #{tpu_custom_call.1} parent=77 // pred_fallthru
                _
            $region78: #{tpu_custom_call.1} parent=73 // pred_fallthru
              _
            // Predicated region
            $region79: #{tpu_custom_call.1} parent=73 // pred_check
              _
            $region80: #{tpu_custom_call.1} parent=73 // pred_check_branch
              %346 = sbr.rel target = $region82
            $region81: #{tpu_custom_call.1} parent=73 // pred_region
              %s348 = ssub.s32 256, 1
              loop: start=0, step=1, limit=1
              $region83: #{tpu_custom_call.1} parent=81 // loop_pre_header
                _
              $region84: #{tpu_custom_call.1} parent=81 // loop_header
                %s350 = sphi 0, %s354
                %p351 = scmp.ge.s32.totalorder %s350, 1
                %s355 = sphi %s340, %s340
                %s356 = sphi %s335, %s335
              $region85: #{tpu_custom_call.1} parent=81 // loop_header_branch
                %353 = sbr.rel (%p351) target = $region89
              $region86: #{tpu_custom_call.1} parent=81 // loop_body
                %v357 = vld [vmem:[%s355] sm:%s348]
                %358 = vst [vmem:[%s356] sm:%s348] %v357
                %v359 = vld [vmem:[%s355 + $0x10] sm:%s348]
                %360 = vst [vmem:[%s356 + $0x8] sm:%s348] %v359
                %v361 = vld [vmem:[%s355 + $0x20] sm:%s348]
                %362 = vst [vmem:[%s356 + $0x10] sm:%s348] %v361
                %v363 = vld [vmem:[%s355 + $0x30] sm:%s348]
                %364 = vst [vmem:[%s356 + $0x18] sm:%s348] %v363
              $region87: #{tpu_custom_call.1} parent=81 // loop_footer
                %s354 = sadd.s32 1, %s350
              $region88: #{tpu_custom_call.1} parent=81 // loop_footer_branch
                %349 = sbr.rel target = $region84
              $region89: #{tpu_custom_call.1} parent=81 // loop_exit
                _
            $region82: #{tpu_custom_call.1} parent=73 // pred_fallthru
              _
          $region74: #{tpu_custom_call.1} parent=69 // pred_fallthru
            _
          %385 = vnop
        $region70: #{tpu_custom_call.1} parent=15 // pred_fallthru
          _
      $region16: #{tpu_custom_call.1} parent=5 // pred_fallthru
        _
      %p386 = scmp.le.s32.totalorder 1, %s20
      %p387 = scmp.lt.s32.totalorder %s20, 5
      %p388 = pnand %p386, %p387
      %p389 = pneg %p388
      // Predicated region
      $region105: #{tpu_custom_call.1} parent=5 // pred_check
        _
      $region106: #{tpu_custom_call.1} parent=5 // pred_check_branch
        %391 = sbr.rel (%p388) target = $region108
      $region107: #{tpu_custom_call.1} parent=5 // pred_region
        %s392 = ssub.s32 %s20, 1
        %s393 = sand.u32 %s47, 1
        %s394 = sand.u32 %s47, 1
        %s395 = smul.addr %s394, 32
        %s396 = scalar_lea.vmem [#allocation2], %s395
        // Predicated region
        $region109: #{tpu_custom_call.1} parent=107 // pred_check
          %p397 = pneg %p60
        $region110: #{tpu_custom_call.1} parent=107 // pred_check_branch
          %399 = sbr.rel (%p397) target = $region112
        $region111: #{tpu_custom_call.1} parent=107 // pred_region
          _
        $region112: #{tpu_custom_call.1} parent=107 // pred_fallthru
          _
        %s400 = sand.u32 %s75, 1
        %s401 = scalar_lea.sflag [#allocation4], %s400
        %s402 = sand.u32 %s75, 1
        %s403 = smul.addr %s402, 32
        %s404 = scalar_lea.vmem [#allocation3], %s403
        // Predicated region
        $region113: #{tpu_custom_call.1} parent=107 // pred_check
          %p405 = pneg %p88
        $region114: #{tpu_custom_call.1} parent=107 // pred_check_branch
          %407 = sbr.rel (%p405) target = $region116
        $region115: #{tpu_custom_call.1} parent=107 // pred_region
          %408 = dma.done %s401, 512
        $region116: #{tpu_custom_call.1} parent=107 // pred_fallthru
          _
        %s409 = sand.u32 %s103, 1
        %s410 = scalar_lea.sflag [#allocation7], %s409
        %s411 = sand.u32 %s103, 1
        %s412 = smul.addr %s411, 32
        %s413 = scalar_lea.vmem [#allocation6], %s412
        // Predicated region
        $region117: #{tpu_custom_call.1} parent=107 // pred_check
          %p414 = pneg %p116
        $region118: #{tpu_custom_call.1} parent=107 // pred_check_branch
          %416 = sbr.rel (%p414) target = $region120
        $region119: #{tpu_custom_call.1} parent=107 // pred_region
          %417 = dma.done %s410, 512
        $region120: #{tpu_custom_call.1} parent=107 // pred_fallthru
          _
        %s418 = sand.u32 %s157, 1
        %s419 = sand.u32 %s157, 1
        %s420 = smul.addr %s419, 32
        %s421 = scalar_lea.vmem [#allocation8], %s420
        // Predicated region
        $region121: #{tpu_custom_call.1} parent=107 // pred_check
          %p422 = pneg %p170
        $region122: #{tpu_custom_call.1} parent=107 // pred_check_branch
          %424 = sbr.rel (%p422) target = $region124
        $region123: #{tpu_custom_call.1} parent=107 // pred_region
          _
        $region124: #{tpu_custom_call.1} parent=107 // pred_fallthru
          _
        %s425 = sand.u32 %s47, 1
        %s426 = sand.u32 %s47, 1
        %s427 = smul.addr %s426, 32
        %s428 = scalar_lea.vmem [#allocation2], %s427
        %p429 = pneg %p60
        %p430 = pneg %p57
        %s431 = sand.u32 %s75, 1
        %s432 = scalar_lea.sflag [#allocation4], %s431
        %s433 = sand.u32 %s75, 1
        %s434 = smul.addr %s433, 32
        %s435 = scalar_lea.vmem [#allocation3], %s434
        %p436 = pneg %p88
        %p437 = pneg %p85
        %s438 = sand.u32 %s103, 1
        %s439 = scalar_lea.sflag [#allocation7], %s438
        %s440 = sand.u32 %s103, 1
        %s441 = smul.addr %s440, 32
        %s442 = scalar_lea.vmem [#allocation6], %s441
        %p443 = pneg %p116
        %p444 = pneg %p113
        %s445 = smul.u32 4, %s29
        %p446 = scmp.lt.s32.totalorder %s445, 7
        %s447 = scalar_select %p446, %s445, 7
        %s448 = smul.addr %s447, 8
        %s449 = scalar_lea.vmem %s3, %s448
        %p450 = pneg %p142
        %p451 = pneg %p139
        %s452 = sand.u32 %s157, 1
        %s453 = sand.u32 %s157, 1
        %s454 = smul.addr %s453, 32
        %s455 = scalar_lea.vmem [#allocation8], %s454
        %p456 = pneg %p170
        %p457 = pneg %p167
        %p458 = pneg %p198
        %p459 = pneg %p195
        %s460 = sand.u32 %s185, 1
        %s461 = scalar_lea.sflag [#allocation5], %s460
        %s462 = sand.u32 %s185, 1
        %s463 = smul.addr %s462, 8
        %s464 = scalar_lea.vmem [#allocation9], %s463
        %s465 = smul.u32 4, %s29
        %s466 = smul.u32 4, %s29
        %s467 = smul.u32 4, %s29
        %s468 = smul.u32 4, %s29
        %p469 = scmp.lt.s32.totalorder %s468, 7
        %s470 = scalar_select %p469, %s468, 7
        %s471 = smul.addr %s470, 8
        %s472 = scalar_lea.vmem %s3, %s471
        %s473 = smul.u32 4, %s29
        %s474 = smul.u32 4, %s29
        %v475 = vld [vmem:[%s396] sm:$0xff]
        %v476 = vld [vmem:[%s396 + $0x8] sm:$0xff]
        %v477 = vld [vmem:[%s396 + $0x10] sm:$0xff]
        %v478 = vld [vmem:[%s396 + $0x18] sm:$0xff]
        %v479 = vld [vmem:[%s404] sm:$0xff]
        %v480 = vld [vmem:[%s404 + $0x8] sm:$0xff]
        %v481 = vld [vmem:[%s404 + $0x10] sm:$0xff]
        %v482 = vld [vmem:[%s404 + $0x18] sm:$0xff]
        %v483 = vld [vmem:[%s413] sm:$0xff]
        %v484 = vld [vmem:[%s413 + $0x8] sm:$0xff]
        %v485 = vld [vmem:[%s413 + $0x10] sm:$0xff]
        %v486 = vld [vmem:[%s413 + $0x18] sm:$0xff]
        %v487 = vld [vmem:[%s472] sm:$0xff]
        %v488 = vld [vmem:[%s472 + $0x8] sm:$0xff]
        %v489 = vld [vmem:[%s472 + $0x10] sm:$0xff]
        %v490 = vld [vmem:[%s472 + $0x18] sm:$0xff]
        %v491 = vsub.f32 %v479, %v475
        %v492 = vsub.f32 %v480, %v476
        %v493 = vsub.f32 %v481, %v477
        %v494 = vsub.f32 %v482, %v478
        %v495 = vmul.f32 %v491, 1.442695
        %v496 = vpow.pop %v495
        %v497 = vmul.f32 %v492, 1.442695
        %v498 = vpow.pop %v497
        %v499 = vmul.f32 %v493, 1.442695
        %v500 = vpow.pop %v499
        %v501 = vmul.f32 %v494, 1.442695
        %v502 = vpow.pop %v501
        %v503 = vmax.f32 %v496, 0.9
        %v504 = vmax.f32 %v498, 0.9
        %v505 = vmax.f32 %v500, 0.9
        %v506 = vmax.f32 %v502, 0.9
        %v507 = vmin.f32 %v503, 1.1
        %v508 = vmin.f32 %v504, 1.1
        %v509 = vmin.f32 %v505, 1.1
        %v510 = vmin.f32 %v506, 1.1
        %512 = vset.pattern.permute.xlu0 0
        %513 = vperm.xlu0 %512, %v487
        %v514 = vpop.permute.xlu0 %513
        %517 = vset.pattern.permute.xlu0 0
        %518 = vperm.xlu0 %517, %v488
        %v519 = vpop.permute.xlu0 %518
        %522 = vset.pattern.permute.xlu0 0
        %523 = vperm.xlu0 %522, %v489
        %v524 = vpop.permute.xlu0 %523
        %527 = vset.pattern.permute.xlu0 0
        %528 = vperm.xlu0 %527, %v490
        %v529 = vpop.permute.xlu0 %528
        %v531 = vmul.f32 %v514, %v507
        %v532 = vmul.f32 %v519, %v508
        %v533 = vmul.f32 %v524, %v509
        %v534 = vmul.f32 %v529, %v510
        %v535 = vmul.f32 %v514, %v496
        %v536 = vmul.f32 %v519, %v498
        %v537 = vmul.f32 %v524, %v500
        %v538 = vmul.f32 %v529, %v502
        %vm539 = vcmp.lt.f32.partialorder %v531, %v535
        %vm540 = vcmp.lt.f32.partialorder %v532, %v536
        %vm541 = vcmp.lt.f32.partialorder %v533, %v537
        %vm542 = vcmp.lt.f32.partialorder %v534, %v538
        %v543 = vsel %vm539, %v531, %v535
        %v544 = vsel %vm540, %v532, %v536
        %v545 = vsel %vm541, %v533, %v537
        %v546 = vsel %vm542, %v534, %v538
        %v547 = vsel %vm539, 1, 0
        %v548 = vsel %vm540, 1, 0
        %v549 = vsel %vm541, 1, 0
        %v550 = vsel %vm542, 1, 0
        %v551 = vcvt.s32.f32 %v547
        %v552 = vcvt.s32.f32 %v548
        %v553 = vcvt.s32.f32 %v549
        %v554 = vcvt.s32.f32 %v550
        %v555 = vsub.f32 %v483, %v479
        %v556 = vsub.f32 %v484, %v480
        %v557 = vsub.f32 %v485, %v481
        %v558 = vsub.f32 %v486, %v482
        %v559 = vmul.f32 %v555, 1.442695
        %v560 = vpow.pop %v559
        %v561 = vmul.f32 %v556, 1.442695
        %v562 = vpow.pop %v561
        %v563 = vmul.f32 %v557, 1.442695
        %v564 = vpow.pop %v563
        %v565 = vmul.f32 %v558, 1.442695
        %v566 = vpow.pop %v565
        %v567 = vsub.f32 %v560, %v555
        %v568 = vsub.f32 %v562, %v556
        %v569 = vsub.f32 %v564, %v557
        %v570 = vsub.f32 %v566, %v558
        %v571 = vsub.f32 %v567, 1.0
        %v572 = vsub.f32 %v568, 1.0
        %v573 = vsub.f32 %v569, 1.0
        %v574 = vsub.f32 %v570, 1.0
        %v575 = vld [vmem:[%s421] sm:$0xff]
        %v576 = vld [vmem:[%s421 + $0x8] sm:$0xff]
        %v577 = vld [vmem:[%s421 + $0x10] sm:$0xff]
        %v578 = vld [vmem:[%s421 + $0x18] sm:$0xff]
        %vm579 = vcmp.ne.s32.totalorder %v575, 0
        %vm580 = vcmp.ne.s32.totalorder %v576, 0
        %vm581 = vcmp.ne.s32.totalorder %v577, 0
        %vm582 = vcmp.ne.s32.totalorder %v578, 0
        %v583 = vsel %vm579, %v543, 0.0
        %v584 = vsel %vm580, %v544, 0.0
        %v585 = vsel %vm581, %v545, 0.0
        %v586 = vsel %vm582, %v546, 0.0
        %v587 = vadd.f32 %v583, %v584
        %v588 = vadd.f32 %v587, %v585
        %v589 = vadd.f32 %v588, %v586
        %590 = vadd.xlane.f32.xlu0 %v589
        %v591 = vpop.xlane.xlu0 %590
        %v592 = vrot.slane %v591, 4
        %v593 = vadd.f32 %v591, %v592
        %v594 = vrot.slane %v593, 2
        %v595 = vadd.f32 %v593, %v594
        %v596 = vrot.slane %v595, 1
        %v597 = vadd.f32 %v595, %v596
        %s598 = vtos %v597
        %v599 = vsel %vm579, %v551, 0.0
        %v600 = vsel %vm580, %v552, 0.0
        %v601 = vsel %vm581, %v553, 0.0
        %v602 = vsel %vm582, %v554, 0.0
        %v603 = vadd.f32 %v599, %v600
        %v604 = vadd.f32 %v603, %v601
        %v605 = vadd.f32 %v604, %v602
        %606 = vadd.xlane.f32.xlu0 %v605
        %v607 = vpop.xlane.xlu0 %606
        %v608 = vrot.slane %v607, 4
        %v609 = vadd.f32 %v607, %v608
        %v610 = vrot.slane %v609, 2
        %v611 = vadd.f32 %v609, %v610
        %v612 = vrot.slane %v611, 1
        %v613 = vadd.f32 %v611, %v612
        %s614 = vtos %v613
        %v615 = vsel %vm579, %v571, 0.0
        %v616 = vsel %vm580, %v572, 0.0
        %v617 = vsel %vm581, %v573, 0.0
        %v618 = vsel %vm582, %v574, 0.0
        %v619 = vadd.f32 %v615, %v616
        %v620 = vadd.f32 %v619, %v617
        %v621 = vadd.f32 %v620, %v618
        %622 = vadd.xlane.f32.xlu0 %v621
        %v623 = vpop.xlane.xlu0 %622
        %v624 = vrot.slane %v623, 4
        %v625 = vadd.f32 %v623, %v624
        %v626 = vrot.slane %v625, 2
        %v627 = vadd.f32 %v625, %v626
        %v628 = vrot.slane %v627, 1
        %v629 = vadd.f32 %v627, %v628
        %s630 = vtos %v629
        %v631 = vsel %vm579, 1.0, 0.0
        %v632 = vsel %vm580, 1.0, 0.0
        %v633 = vsel %vm581, 1.0, 0.0
        %v634 = vsel %vm582, 1.0, 0.0
        %v635 = vadd.f32 %v631, %v632
        %v636 = vadd.f32 %v635, %v633
        %v637 = vadd.f32 %v636, %v634
        %638 = vadd.xlane.f32.xlu0 %v637
        %v639 = vpop.xlane.xlu0 %638
        %v640 = vrot.slane %v639, 4
        %v641 = vadd.f32 %v639, %v640
        %v642 = vrot.slane %v641, 2
        %v643 = vadd.f32 %v641, %v642
        %v644 = vrot.slane %v643, 1
        %v645 = vadd.f32 %v643, %v644
        %s646 = vtos %v645
        %v647 = vadd.f32 %v496, %v498
        %v648 = vadd.f32 %v647, %v500
        %v649 = vadd.f32 %v648, %v502
        %650 = vadd.xlane.f32.xlu0 %v649
        %v651 = vpop.xlane.xlu0 %650
        %v652 = vrot.slane %v651, 4
        %v653 = vadd.f32 %v651, %v652
        %v654 = vrot.slane %v653, 2
        %v655 = vadd.f32 %v653, %v654
        %v656 = vrot.slane %v655, 1
        %v657 = vadd.f32 %v655, %v656
        %s658 = vtos %v657
        %v659 = vlaneseq
        %v660 = vshrl.u32 %v659, 7
        %vm661 = vcmp.eq.s32.totalorder %v660, 0
        %vm662 = vcmp.eq.s32.totalorder %v660, 1
        %vm663 = vcmp.eq.s32.totalorder %v660, 2
        %vm664 = vcmp.eq.s32.totalorder %v660, 3
        %vm665 = vcmp.eq.s32.totalorder %v660, 4
        %v666 = vstv %s646
        %v667 = vsel %vm665, %v666, 0.0
        %v668 = vstv %s658
        %v669 = vsel %vm664, %v668, %v667
        %v670 = vstv %s630
        %v671 = vsel %vm663, %v670, %v669
        %v672 = vstv %s614
        %v673 = vsel %vm662, %v672, %v671
        %v674 = vstv %s598
        %v675 = vsel %vm661, %v674, %v673
        %676 = vst [vmem:[%s464] sm:$0xff] %v675
        %s677 = sand.u32 %s185, 1
        %s678 = scalar_lea.sflag [#allocation5], %s677
        %s679 = sand.u32 %s185, 1
        %s680 = smul.addr %s679, 8
        %s681 = scalar_lea.vmem [#allocation9], %s680
        // Predicated region
        $region125: #{tpu_custom_call.1} parent=107 // pred_check
          %p682 = pneg %p195
        $region126: #{tpu_custom_call.1} parent=107 // pred_check_branch
          %684 = sbr.rel (%p682) target = $region128
        $region127: #{tpu_custom_call.1} parent=107 // pred_region
          %s686 = ssub.s32 128, 128
          %687 = vsyncadd %s678, %s686
          %s688 = smul.addr %s29, 2
          %s689 = sadd.s32 %s30, %s688
          %s690 = smul.addr %s689, 128
          %s691 = scalar_lea.hbm %s5, %s690
          %s693 = sshll.u32 %s681, 4
          %s694 = int_to_ptr.vmem [resolvable:$true] %s693
          %696 = dma.vmem_to_hbm [thread:$0]  %s694, 128, %s691, %s678
        $region128: #{tpu_custom_call.1} parent=107 // pred_fallthru
          _
      $region108: #{tpu_custom_call.1} parent=5 // pred_fallthru
        _
      %p697 = scmp.le.s32.totalorder 2, %s20
      // Predicated region
      $region129: #{tpu_custom_call.1} parent=5 // pred_check
        %p698 = pneg %p697
      $region130: #{tpu_custom_call.1} parent=5 // pred_check_branch
        %700 = sbr.rel (%p698) target = $region132
      $region131: #{tpu_custom_call.1} parent=5 // pred_region
        %s701 = ssub.s32 %s20, 2
        // Predicated region
        $region133: #{tpu_custom_call.1} parent=131 // pred_check
          %p702 = pneg %p201
        $region134: #{tpu_custom_call.1} parent=131 // pred_check_branch
          %704 = sbr.rel (%p702) target = $region136
        $region135: #{tpu_custom_call.1} parent=131 // pred_region
          %s705 = sand.u32 %s186, 1
          %s706 = scalar_lea.sflag [#allocation5], %s705
          %s707 = sand.u32 %s186, 1
          %s708 = smul.addr %s707, 8
          %s709 = scalar_lea.vmem [#allocation9], %s708
          %710 = dma.done %s706, 128
        $region136: #{tpu_custom_call.1} parent=131 // pred_fallthru
          _
      $region132: #{tpu_custom_call.1} parent=5 // pred_fallthru
        _
    $region6: #{tpu_custom_call.1} parent=1 // loop_footer
      %s24 = sadd.s32 1, %s20
    $region7: #{tpu_custom_call.1} parent=1 // loop_footer_branch
      %19 = sbr.rel target = $region3
    $region8: #{tpu_custom_call.1} parent=1 // loop_exit
      _
    %711 = vsyncpa [#allocation4], 1
    %s712 = scalar_lea.sflag [#allocation4], 1
    %713 = vsyncpa %s712, 1
    %714 = vsyncpa [#allocation7], 1
    %s715 = scalar_lea.sflag [#allocation7], 1
    %716 = vsyncpa %s715, 1
    %717 = vsyncpa [#allocation5], 1
    %s718 = scalar_lea.sflag [#allocation5], 1
    %719 = vsyncpa %s718, 1

</llo_original>
